<compile_context>
chip_gen: v7x
topology: tpu7x:2x2x1
jax: 0.10.0
libtpu: 0.0.40
codegen_flags: <defaults>
</compile_context>

<pallas_src>
import functools

import numpy as np
import jax
import jax.numpy as jnp
from jax.experimental import pallas as pl
from jax.experimental.pallas import tpu as pltpu

NORM_TEMPERATURE = 50.0
NORM_EPS = 1e-12          # F.normalize default eps (applied as a clamp on the norm)
NORM_WEIGHT = True


def _round_up(v, m):
    return (v + m - 1) // m * m


def _pad_lane_dim(d):
    """Pad a lane dimension to 128; prefer 256-multiples (v6e/v7x MXU is
    2x256x256) when the extra padded work is small."""
    p = _round_up(d, 128)
    if p % 256 != 0 and p >= 1024:
        p = _round_up(d, 256)
    return p


def _texe_embed_kernel(x_ref, wt_ref, b_ref, te_ref, o_ref, h_ref, inv_ref,
                       *, reuse_h):
    def compute_h():
        # Linear: bf16 MXU operands, f32 accumulation, f32 bias add.
        h = jnp.dot(x_ref[...].astype(jnp.bfloat16), wt_ref[...],
                    preferred_element_type=jnp.float32)
        h = h + b_ref[...]
        if NORM_WEIGHT:
            # 1 / max(||h||, eps) == rsqrt(max(||h||^2, eps^2))  -> EUP slot.
            sq = jnp.sum(h * h, axis=1, keepdims=True)
            inv_ref[...] = NORM_TEMPERATURE * jax.lax.rsqrt(
                jnp.maximum(sq, NORM_EPS * NORM_EPS))
        else:
            inv_ref[...] = jnp.ones(inv_ref.shape, jnp.float32)
        h_ref[...] = h.astype(jnp.bfloat16)

    if reuse_h:
        # h depends only on the row tile: compute once (first class step) and
        # reuse across all class tiles of this row tile.
        @pl.when(pl.program_id(1) == 0)
        def _():
            compute_h()
    else:
        compute_h()

    # Projection onto the text embeddings; per-row norm/temperature scale is
    # applied after the matmul (identical math, stays in f32).
    o = jnp.dot(h_ref[...], te_ref[...], preferred_element_type=jnp.float32)
    o_ref[...] = (o * inv_ref[...]).astype(o_ref.dtype)


@functools.partial(jax.jit,
                   static_argnames=("block_rows", "block_cols", "out_dtype"))
def texe_embed_classifier(x, weight, bias, text_embed, block_rows=256,
                          block_cols=512, out_dtype=jnp.bfloat16):
    n, k = x.shape
    zs_dim = weight.shape[0]
    num_classes = text_embed.shape[1]

    # Tiles: rows a multiple of 8 (sublane), lane dims multiples of 128.
    tm = _round_up(min(block_rows, n), 8)
    zs_pad = _pad_lane_dim(zs_dim)
    c_pad = _round_up(num_classes, 128)
    tn = min(_round_up(block_cols, 128), c_pad)
    c_pad = _round_up(c_pad, tn)

    n_tiles = pl.cdiv(n, tm)
    c_tiles = c_pad // tn

    # Reuse h across class tiles whenever the class axis runs serially; when
    # there is a single row tile but several class tiles, recompute h per
    # class tile so both axes can be megacore-parallel on v7x.
    reuse_h = (c_tiles == 1) or (n_tiles > 1)
    class_sem = "arbitrary" if reuse_h else "parallel"

    # Zero padding is mathematically neutral: padded zs columns of W^T / bias
    # produce exact zeros in h (row norms unchanged); padded zs rows / class
    # columns of text_embed contribute nothing / are sliced off below.
    wt_p = jnp.zeros((k, zs_pad), jnp.bfloat16).at[:, :zs_dim].set(
        weight.T.astype(jnp.bfloat16))
    b_p = jnp.zeros((1, zs_pad), jnp.float32).at[:, :zs_dim].set(
        bias.reshape(1, zs_dim).astype(jnp.float32))
    te_p = jnp.zeros((zs_pad, c_pad), jnp.bfloat16).at[:zs_dim, :num_classes].set(
        text_embed.astype(jnp.bfloat16))

    # Per-generation VMEM budget (v5e/v6e 128 MiB physical, v7x 64 MiB).
    try:
        vmem_cap = int(pltpu.get_tpu_info().vmem_capacity_bytes)
        vmem_limit = max(32 << 20, min(100 << 20, (vmem_cap * 3) // 4))
    except Exception:  # conservative fallback that fits every generation
        vmem_limit = 48 << 20

    rows = n_tiles * tm
    lin_reps = 1 if reuse_h else c_tiles
    flops = 2 * rows * k * zs_pad * lin_reps + 2 * rows * zs_pad * c_pad
    out_bytes = np.dtype(out_dtype).itemsize * n * c_pad
    bytes_accessed = (4 * n * k + 2 * k * zs_pad + 4 * zs_pad
                      + 2 * zs_pad * c_pad + out_bytes)

    kernel = functools.partial(_texe_embed_kernel, reuse_h=reuse_h)

    out = pl.pallas_call(
        kernel,
        out_shape=jax.ShapeDtypeStruct((n, c_pad), out_dtype),
        grid=(n_tiles, c_tiles),
        in_specs=[
            # x: tiled over rows, block index constant in j -> no re-DMA across
            # class tiles; ragged last row tile handled by partial blocks, so
            # no wrapper pad/cast HBM round trip on the activation.
            pl.BlockSpec((tm, k), lambda i, j: (i, 0)),
            # W^T / bias: grid-invariant -> single-buffered VMEM residents.
            pl.BlockSpec((k, zs_pad), lambda i, j: (0, 0),
                         pipeline_mode=pl.Buffered(1)),
            pl.BlockSpec((1, zs_pad), lambda i, j: (0, 0),
                         pipeline_mode=pl.Buffered(1)),
            # text_embed: blocked over classes (resident when c_tiles == 1).
            pl.BlockSpec((zs_pad, tn), lambda i, j: (0, j),
                         pipeline_mode=(pl.Buffered(1) if c_tiles == 1
                                        else pl.Buffered(2))),
        ],
        out_specs=pl.BlockSpec((tm, tn), lambda i, j: (i, j)),
        scratch_shapes=[
            pltpu.VMEM((tm, zs_pad), jnp.bfloat16),   # h (post-linear, unscaled)
            pltpu.VMEM((tm, 1), jnp.float32),         # per-row 50 / max(||h||, eps)
        ],
        compiler_params=pltpu.CompilerParams(
            dimension_semantics=("parallel", class_sem),
            vmem_limit_bytes=vmem_limit,
        ),
        cost_estimate=pl.CostEstimate(
            flops=int(flops), transcendentals=int(rows),
            bytes_accessed=int(bytes_accessed)),
    )(x, wt_p, b_p, te_p)

    # TODO(synk): for very large input_size (K = C*W*H in the many thousands),
    # add a K-reduction grid axis ("arbitrary") with an f32 VMEM accumulator
    # and gate the normalization + projection on the last K step, so W^T does
    # not have to be fully VMEM-resident.
    if c_pad != num_classes:
        # Rows are already exact (out_shape rows == n); downstream code that
        # can mask padded classes may skip this slice entirely.
        out = out[:, :num_classes]
    return out


def _reference_f32(x, weight, bias, text_embed):
    h = x @ weight.T + bias
    if NORM_WEIGHT:
        norm = jnp.sqrt(jnp.sum(h * h, axis=1, keepdims=True))
        h = NORM_TEMPERATURE * h / jnp.maximum(norm, NORM_EPS)
    return h @ text_embed


def _reference_matched(x, weight, bias, text_embed):
    # Mirrors kernel precision: bf16 MXU operands, f32 accumulation / norm,
    # per-row scale applied after the projection, bf16 output.
    h = jnp.dot(x.astype(jnp.bfloat16), weight.T.astype(jnp.bfloat16),
                preferred_element_type=jnp.float32) + bias.astype(jnp.float32)
    if NORM_WEIGHT:
        sq = jnp.sum(h * h, axis=1, keepdims=True)
        inv = NORM_TEMPERATURE * jax.lax.rsqrt(
            jnp.maximum(sq, NORM_EPS * NORM_EPS))
    else:
        inv = 1.0
    o = jnp.dot(h.astype(jnp.bfloat16), text_embed.astype(jnp.bfloat16),
                preferred_element_type=jnp.float32) * inv
    return o.astype(jnp.bfloat16)


if __name__ == "__main__":
    key = jax.random.PRNGKey(0)

    cases = [
        # single row tile, single class tile, heavy lane padding
        dict(n=8, input_size=32, zs_dim=64, num_classes=16,
             block_rows=256, block_cols=512),
        # multiple row tiles, single class tile, non-128 dims everywhere
        dict(n=300, input_size=160, zs_dim=192, num_classes=200,
             block_rows=128, block_cols=512),
        # multiple row tiles AND class tiles (h reused across class tiles)
        dict(n=300, input_size=160, zs_dim=192, num_classes=1000,
             block_rows=128, block_cols=512),
        # single row tile, multiple class tiles (h recomputed, both axes parallel)
        dict(n=16, input_size=64, zs_dim=128, num_classes=700,
             block_rows=256, block_cols=256),
    ]

    for idx, c in enumerate(cases):
        kx, kw, kb, kt, key = jax.random.split(key, 5)
        x = jax.random.normal(kx, (c["n"], c["input_size"]), jnp.float32)
        weight = jax.random.normal(
            kw, (c["zs_dim"], c["input_size"]), jnp.float32) * 0.02
        bias = jax.random.normal(kb, (c["zs_dim"],), jnp.float32) * 0.01
        text_embed = jax.random.normal(
            kt, (c["zs_dim"], c["num_classes"]), jnp.float32)

        out = texe_embed_classifier(x, weight, bias, text_embed,
                                    block_rows=c["block_rows"],
                                    block_cols=c["block_cols"])
        jax.block_until_ready(out)
        assert out.shape == (c["n"], c["num_classes"]), f"case {idx}: bad shape"

        out_f32 = out.astype(jnp.float32)

        ref_m = _reference_matched(x, weight, bias, text_embed).astype(jnp.float32)
        assert jnp.allclose(out_f32, ref_m, atol=0.25, rtol=2e-2), (
            f"case {idx}: mismatch vs precision-matched reference")

        ref_f32 = _reference_f32(x, weight, bias, text_embed)
        assert jnp.allclose(out_f32, ref_f32, atol=2.5, rtol=5e-2), (
            f"case {idx}: mismatch vs f32 reference")

    print("KERNEL_OK")
</pallas_src>

<mosaic_0001>
module attributes {stable_mosaic.version = 11 : i64} {
  func.func @_texe_embed_kernel(%arg0: i32, %arg1: i32, %arg2: memref<8x32xf32, #tpu.memory_space<vmem>>, %arg3: memref<32x128xbf16, #tpu.memory_space<vmem>>, %arg4: memref<1x128xf32, #tpu.memory_space<vmem>>, %arg5: memref<128x128xbf16, #tpu.memory_space<vmem>>, %arg6: memref<8x128xbf16, #tpu.memory_space<vmem>>, %arg7: memref<8x128xbf16, #tpu.memory_space<vmem>>, %arg8: memref<8x1xf32, #tpu.memory_space<vmem>>) attributes {dimension_semantics = [#tpu.dimension_semantics<parallel>, #tpu.dimension_semantics<arbitrary>], iteration_bounds = array<i64: 1, 1>, scalar_prefetch = 0 : i64, scratch_operands = 2 : i64, tpu.core_type = #tpu.core_type<tc>, window_params = [{transform_indices = @transform_0, window_bounds = array<i64: 8, 32>}, {pipeline_mode = #tpu.pipeline_mode<synchronous>, transform_indices = @transform_1, window_bounds = array<i64: 32, 128>}, {pipeline_mode = #tpu.pipeline_mode<synchronous>, transform_indices = @transform_2, window_bounds = array<i64: 1, 128>}, {pipeline_mode = #tpu.pipeline_mode<synchronous>, transform_indices = @transform_3, window_bounds = array<i64: 128, 128>}, {transform_indices = @transform_4, window_bounds = array<i64: 8, 128>}]} {
    %c0_i32 = arith.constant 0 : i32
    %0 = arith.cmpi eq, %arg1, %c0_i32 : i32
    %1 = arith.extui %0 : i1 to i32
    %c0_i32_0 = arith.constant 0 : i32
    %2 = arith.cmpi ne, %1, %c0_i32_0 : i32
    scf.if %2 {
      %c0_8 = arith.constant 0 : index
      %c0_9 = arith.constant 0 : index
      %11 = vector.load %arg2[%c0_8, %c0_9] : memref<8x32xf32, #tpu.memory_space<vmem>>, vector<8x32xf32>
      %12 = arith.truncf %11 : vector<8x32xf32> to vector<8x32xbf16>
      %c0_10 = arith.constant 0 : index
      %c0_11 = arith.constant 0 : index
      %13 = vector.load %arg3[%c0_10, %c0_11] : memref<32x128xbf16, #tpu.memory_space<vmem>>, vector<32x128xbf16>
      %cst_12 = arith.constant dense<0.000000e+00> : vector<8x128xf32>
      %14 = tpu.matmul %12, %13, %cst_12 {dimension_numbers = #tpu.dot_dimension_numbers<[1], [0], [0], [1], [0, 0, 1, 1], [], []>} : vector<8x32xbf16>, vector<32x128xbf16>, vector<8x128xf32> -> vector<8x128xf32>
      %c0_13 = arith.constant 0 : index
      %c0_14 = arith.constant 0 : index
      %15 = vector.load %arg4[%c0_13, %c0_14] : memref<1x128xf32, #tpu.memory_space<vmem>>, vector<1x128xf32>
      %16 = vector.broadcast %15 : vector<1x128xf32> to vector<8x128xf32>
      %17 = arith.addf %14, %16 : vector<8x128xf32>
      %18 = arith.mulf %17, %17 : vector<8x128xf32>
      %cst_15 = arith.constant dense<0.000000e+00> : vector<8xf32>
      %19 = vector.multi_reduction <add>, %18, %cst_15 [1] : vector<8x128xf32> to vector<8xf32>
      %20 = vector.shape_cast %19 : vector<8xf32> to vector<8x1xf32>
      %cst_16 = arith.constant 1.000000e-24 : f32
      %21 = vector.broadcast %cst_16 : f32 to vector<8x1xf32>
      %22 = arith.maximumf %20, %21 : vector<8x1xf32>
      %23 = math.rsqrt %22 : vector<8x1xf32>
      %cst_17 = arith.constant 5.000000e+01 : f32
      %24 = vector.broadcast %cst_17 : f32 to vector<8x1xf32>
      %25 = arith.mulf %24, %23 : vector<8x1xf32>
      %c0_18 = arith.constant 0 : index
      %c0_19 = arith.constant 0 : index
      %26 = vector.load %arg8[%c0_18, %c0_19] : memref<8x1xf32, #tpu.memory_space<vmem>>, vector<8x1xf32>
      tpu.vector_store %arg8[%c0_18, %c0_19], %25 {strides = array<i32>} : memref<8x1xf32, #tpu.memory_space<vmem>>, vector<8x1xf32>,
      %27 = arith.truncf %17 : vector<8x128xf32> to vector<8x128xbf16>
      %c0_20 = arith.constant 0 : index
      %c0_21 = arith.constant 0 : index
      %28 = vector.load %arg7[%c0_20, %c0_21] : memref<8x128xbf16, #tpu.memory_space<vmem>>, vector<8x128xbf16>
      tpu.vector_store %arg7[%c0_20, %c0_21], %27 {strides = array<i32>} : memref<8x128xbf16, #tpu.memory_space<vmem>>, vector<8x128xbf16>,
    } else {
    }
    %c0 = arith.constant 0 : index
    %c0_1 = arith.constant 0 : index
    %3 = vector.load %arg7[%c0, %c0_1] : memref<8x128xbf16, #tpu.memory_space<vmem>>, vector<8x128xbf16>
    %c0_2 = arith.constant 0 : index
    %c0_3 = arith.constant 0 : index
    %4 = vector.load %arg5[%c0_2, %c0_3] : memref<128x128xbf16, #tpu.memory_space<vmem>>, vector<128x128xbf16>
    %cst = arith.constant dense<0.000000e+00> : vector<8x128xf32>
    %5 = tpu.matmul %3, %4, %cst {dimension_numbers = #tpu.dot_dimension_numbers<[1], [0], [0], [1], [0, 0, 1, 1], [], []>} : vector<8x128xbf16>, vector<128x128xbf16>, vector<8x128xf32> -> vector<8x128xf32>
    %c0_4 = arith.constant 0 : index
    %c0_5 = arith.constant 0 : index
    %6 = vector.load %arg8[%c0_4, %c0_5] : memref<8x1xf32, #tpu.memory_space<vmem>>, vector<8x1xf32>
    %7 = vector.broadcast %6 : vector<8x1xf32> to vector<8x128xf32>
    %8 = arith.mulf %5, %7 : vector<8x128xf32>
    %9 = arith.truncf %8 : vector<8x128xf32> to vector<8x128xbf16>
    %c0_6 = arith.constant 0 : index
    %c0_7 = arith.constant 0 : index
    %10 = vector.load %arg6[%c0_6, %c0_7] : memref<8x128xbf16, #tpu.memory_space<vmem>>, vector<8x128xbf16>
    tpu.vector_store %arg6[%c0_6, %c0_7], %9 {strides = array<i32>} : memref<8x128xbf16, #tpu.memory_space<vmem>>, vector<8x128xbf16>,
    return
  }
  func.func @transform_0(%arg0: i32, %arg1: i32) -> (i32, i32) {
    %c0_i32 = arith.constant 0 : i32
    %c0_i32_0 = arith.constant 0 : i32
    return %arg0, %c0_i32 : i32, i32
  }
  func.func @transform_1(%arg0: i32, %arg1: i32) -> (i32, i32) {
    %c0_i32 = arith.constant 0 : i32
    %c0_i32_0 = arith.constant 0 : i32
    %c0_i32_1 = arith.constant 0 : i32
    return %c0_i32, %c0_i32_0 : i32, i32
  }
  func.func @transform_2(%arg0: i32, %arg1: i32) -> (i32, i32) {
    %c0_i32 = arith.constant 0 : i32
    %c0_i32_0 = arith.constant 0 : i32
    %c0_i32_1 = arith.constant 0 : i32
    return %c0_i32, %c0_i32_0 : i32, i32
  }
  func.func @transform_3(%arg0: i32, %arg1: i32) -> (i32, i32) {
    %c0_i32 = arith.constant 0 : i32
    %c0_i32_0 = arith.constant 0 : i32
    return %c0_i32, %arg1 : i32, i32
  }
  func.func @transform_4(%arg0: i32, %arg1: i32) -> (i32, i32) {
    %c0_i32 = arith.constant 0 : i32
    return %arg0, %arg1 : i32, i32
  }
}

</mosaic_0001>

<llo_original>
// kernel: texe_embed_classifier.1
$region0: #{texe_embed_classifier.1}
  #allocation0 [shape = 'u32[]', space=smem, size = 0x4, offset = 0x4, fixed_abs, tag = 'smem constant byte address 0x4 - core index']
  #allocation1 [shape = 'u32[144,128]{1,0:T(1,128)}', space=vmem, size = 0x12000, scoped, tag = 'internal scratch']
  #allocation2 [shape = 'bf16[8,128]{1,0:T(8,128)(2,1)}', space=vmem, size = 0x800, scoped, tag = 'scratch operand']
  #allocation3 [shape = 'f32[8,1]{1,0:T(8,128)}', space=vmem, size = 0x1000, scoped, tag = 'scratch operand']
  %s0 = inlined_call_operand.vmem [shape: f32[8,32], index: 0, kind: input, shape index: {}]
  %s1 = inlined_call_operand.vmem [shape: bf16[32,128], index: 1, kind: input, shape index: {}]
  %s2 = inlined_call_operand.vmem [shape: f32[1,128], index: 2, kind: input, shape index: {}]
  %s3 = inlined_call_operand.vmem [shape: bf16[128,128], index: 3, kind: input, shape index: {}]
  %s4 = inlined_call_operand.hbm [shape: bf16[8,128], index: 4, kind: output, shape index: {}]
  %s5 = sld [smem:[#allocation0]]
  $region30: #{texe_embed_classifier.1} parent=0
    _
  %s7 = ssub.s32 1, %s5
  %s8 = scalar_select 0, %s7, %s5
  $region1: #{texe_embed_classifier.1} parent=0
    #allocation4 [shape = 'u8[2048]{0}', space=vmem, size = 0x800, scoped, tag = 'output window, operand 0, single buffered']
    #allocation5 [shape = 's32[1]{0}', space=sflag, size = 0x4, scoped, tag = 'scoped memory for texe_embed_classifier.1']
    %9 = vsyncpa [#allocation5], 0
    // Predicated region
    $region2: #{texe_embed_classifier.1} parent=1 // pred_check
      _
    $region3: #{texe_embed_classifier.1} parent=1 // pred_check_branch
      %11 = sbr.rel (0) target = $region5
    $region4: #{texe_embed_classifier.1} parent=1 // pred_region
      _
    $region5: #{texe_embed_classifier.1} parent=1 // pred_fallthru
      _
    // Predicated region
    $region6: #{texe_embed_classifier.1} parent=1 // pred_check
      _
    $region7: #{texe_embed_classifier.1} parent=1 // pred_check_branch
      %13 = sbr.rel (0) target = $region9
    $region8: #{texe_embed_classifier.1} parent=1 // pred_region
      _
    $region9: #{texe_embed_classifier.1} parent=1 // pred_fallthru
      _
    // Predicated region
    $region10: #{texe_embed_classifier.1} parent=1 // pred_check
      _
    $region11: #{texe_embed_classifier.1} parent=1 // pred_check_branch
      %15 = sbr.rel (0) target = $region13
    $region12: #{texe_embed_classifier.1} parent=1 // pred_region
      _
    $region13: #{texe_embed_classifier.1} parent=1 // pred_fallthru
      _
    // Predicated region
    $region14: #{texe_embed_classifier.1} parent=1 // pred_check
      _
    $region15: #{texe_embed_classifier.1} parent=1 // pred_check_branch
      %17 = sbr.rel (0) target = $region17
    $region16: #{texe_embed_classifier.1} parent=1 // pred_region
      _
    $region17: #{texe_embed_classifier.1} parent=1 // pred_fallthru
      _
    %p19 = scmp.eq.s32.totalorder 0, 0
    // Predicated region
    $region18: #{texe_embed_classifier.1} parent=1 // pred_check
      %p20 = pneg %p19
    $region19: #{texe_embed_classifier.1} parent=1 // pred_check_branch
      %22 = sbr.rel (%p20) target = $region21
    $region20: #{texe_embed_classifier.1} parent=1 // pred_region
      %v23 = vld [vmem:[%s0] sm:$0xff]
      %v24 = vpack.c.bf16 %v23, %v23
      %v25 = vld [vmem:[%s1] sm:$0xf]
      %v26 = vld [vmem:[%s1 + $0x4] sm:$0xf]
      %v27 = vld [vmem:[%s1 + $0x8] sm:$0xf]
      %v28 = vld [vmem:[%s1 + $0xc] sm:$0xf]
      %v29 = vld [vmem:[%s2] sm:$0x1]
      %v31 = vlaneseq
      %v32 = vshrl.u32 %v31, 7
      %v33 = vsub.s32 0, %v32
      %v34 = vrot.slane %v29, %v33
      %v40 = vunpack.c.l.b16 %v25
      %v41 = vunpack.c.l.b16 %v26
      %v42 = vunpack.c.l.b16 %v27
      %v43 = vunpack.c.l.b16 %v28
      %v44 = vpack.c.b16 %v41, %v40
      %v45 = vpack.c.b16 %v43, %v42
      %vm48 = vcmask 261120
      %v50 = vsel %vm48, %v24, 0
      %52 = vmatprep.subr.bf16.mxu0 0
      %53 = vmatpush1.bf16.msra.mxu0 %v44
      %54 = vmatprep.subr.bf16.mxu0 0
      %55 = vmatpush1.bf16.msra.mxu0 %v45
      %56 = vmatprep.subr.bf16.mxu0 0
      %57 = vmatpush1.bf16.msra.mxu0 0
      %58 = vmatprep.subr.bf16.mxu0 0
      %59 = vmatpush1.bf16.msra.mxu0 0
      %60 = vmatprep.subr.bf16.mxu0 0
      %61 = vmatpush1.bf16.msra.mxu0 0
      %62 = vmatprep.subr.bf16.mxu0 0
      %63 = vmatpush1.bf16.msra.mxu0 0
      %64 = vmatprep.subr.bf16.mxu0 0
      %65 = vmatpush1.bf16.msra.mxu0 0
      %66 = vmatprep.subr.bf16.mxu0 0
      %67 = vmatpush1.bf16.msra.mxu0 0
      %68 = vmatprep.subr.bf16.mxu0 0
      %69 = vmatpush1.bf16.msra.mxu0 0
      %70 = vmatprep.subr.bf16.mxu0 0
      %71 = vmatpush1.bf16.msra.mxu0 0
      %72 = vmatprep.subr.bf16.mxu0 0
      %73 = vmatpush1.bf16.msra.mxu0 0
      %74 = vmatprep.subr.bf16.mxu0 0
      %75 = vmatpush1.bf16.msra.mxu0 0
      %76 = vmatprep.subr.bf16.mxu0 0
      %77 = vmatpush1.bf16.msra.mxu0 0
      %78 = vmatprep.subr.bf16.mxu0 0
      %79 = vmatpush1.bf16.msra.mxu0 0
      %80 = vmatprep.subr.bf16.mxu0 0
      %81 = vmatpush1.bf16.msra.mxu0 0
      %82 = vmatprep.subr.bf16.mxu0 0
      %83 = vmatpush1.bf16.msra.mxu0 0
      %84 = vmatprep.mubr.bf16.mxu0 0
      %85 = vmatmul.mubr.bf16.gmra.mrb[0].mxu0 %v50
      %v86 = vpop.f32.mrb[0].mxu0
      %v87 = vadd.f32 %v34, %v86
      %v88 = vpop.f32.mrb[0].mxu0
      %v89 = vpop.f32.mrb[0].mxu0
      %v90 = vpop.f32.mrb[0].mxu0
      %91 = vdwg.mxu0
      %v92 = vmul.f32 %v87, %v87
      %93 = vadd.xlane.f32.xlu0 %v92
      %v94 = vpop.xlane.xlu0 %93
      %v95 = vmax.f32 %v94, 1e-24
      %v96 = vrsqrt.pop %v95
      %v97 = vmul.f32 %v96, 50.0
      %vm98 = vcmask 7168
      %99 = vst.msk [vmem:[#allocation3] sm:$0xff] %vm98, %v97
      %v100 = vpack.c.bf16 %v87, %v87
      %101 = vst [vmem:[#allocation2] sm:$0xf] %v100
    $region21: #{texe_embed_classifier.1} parent=1 // pred_fallthru
      _
    %v102 = vld [vmem:[#allocation2] sm:$0xf]
    %v103 = vld [vmem:[%s3] sm:$0xf]
    %v104 = vld [vmem:[%s3 + $0x4] sm:$0xf]
    %v105 = vld [vmem:[%s3 + $0x8] sm:$0xf]
    %v106 = vld [vmem:[%s3 + $0xc] sm:$0xf]
    %v107 = vld [vmem:[%s3 + $0x10] sm:$0xf]
    %v108 = vld [vmem:[%s3 + $0x14] sm:$0xf]
    %v109 = vld [vmem:[%s3 + $0x18] sm:$0xf]
    %v110 = vld [vmem:[%s3 + $0x1c] sm:$0xf]
    %v111 = vld [vmem:[%s3 + $0x20] sm:$0xf]
    %v112 = vld [vmem:[%s3 + $0x24] sm:$0xf]
    %v113 = vld [vmem:[%s3 + $0x28] sm:$0xf]
    %v114 = vld [vmem:[%s3 + $0x2c] sm:$0xf]
    %v115 = vld [vmem:[%s3 + $0x30] sm:$0xf]
    %v116 = vld [vmem:[%s3 + $0x34] sm:$0xf]
    %v117 = vld [vmem:[%s3 + $0x38] sm:$0xf]
    %v118 = vld [vmem:[%s3 + $0x3c] sm:$0xf]
    %v135 = vunpack.c.l.b16 %v103
    %v136 = vunpack.c.l.b16 %v104
    %v137 = vunpack.c.l.b16 %v105
    %v138 = vunpack.c.l.b16 %v106
    %v139 = vunpack.c.l.b16 %v107
    %v140 = vunpack.c.l.b16 %v108
    %v141 = vunpack.c.l.b16 %v109
    %v142 = vunpack.c.l.b16 %v110
    %v143 = vunpack.c.l.b16 %v111
    %v144 = vunpack.c.l.b16 %v112
    %v145 = vunpack.c.l.b16 %v113
    %v146 = vunpack.c.l.b16 %v114
    %v147 = vunpack.c.l.b16 %v115
    %v148 = vunpack.c.l.b16 %v116
    %v149 = vunpack.c.l.b16 %v117
    %v150 = vunpack.c.l.b16 %v118
    %v151 = vpack.c.b16 %v136, %v135
    %v152 = vpack.c.b16 %v138, %v137
    %v153 = vpack.c.b16 %v140, %v139
    %v154 = vpack.c.b16 %v142, %v141
    %v155 = vpack.c.b16 %v144, %v143
    %v156 = vpack.c.b16 %v146, %v145
    %v157 = vpack.c.b16 %v148, %v147
    %v158 = vpack.c.b16 %v150, %v149
    %167 = vmatprep.subr.bf16.mxu0 0
    %168 = vmatpush1.bf16.msra.mxu0 %v151
    %169 = vmatprep.subr.bf16.mxu0 0
    %170 = vmatpush1.bf16.msra.mxu0 %v152
    %171 = vmatprep.subr.bf16.mxu0 0
    %172 = vmatpush1.bf16.msra.mxu0 %v153
    %173 = vmatprep.subr.bf16.mxu0 0
    %174 = vmatpush1.bf16.msra.mxu0 %v154
    %175 = vmatprep.subr.bf16.mxu0 0
    %176 = vmatpush1.bf16.msra.mxu0 %v155
    %177 = vmatprep.subr.bf16.mxu0 0
    %178 = vmatpush1.bf16.msra.mxu0 %v156
    %179 = vmatprep.subr.bf16.mxu0 0
    %180 = vmatpush1.bf16.msra.mxu0 %v157
    %181 = vmatprep.subr.bf16.mxu0 0
    %182 = vmatpush1.bf16.msra.mxu0 %v158
    %183 = vmatprep.subr.bf16.mxu0 0
    %184 = vmatpush1.bf16.msra.mxu0 0
    %185 = vmatprep.subr.bf16.mxu0 0
    %186 = vmatpush1.bf16.msra.mxu0 0
    %187 = vmatprep.subr.bf16.mxu0 0
    %188 = vmatpush1.bf16.msra.mxu0 0
    %189 = vmatprep.subr.bf16.mxu0 0
    %190 = vmatpush1.bf16.msra.mxu0 0
    %191 = vmatprep.subr.bf16.mxu0 0
    %192 = vmatpush1.bf16.msra.mxu0 0
    %193 = vmatprep.subr.bf16.mxu0 0
    %194 = vmatpush1.bf16.msra.mxu0 0
    %195 = vmatprep.subr.bf16.mxu0 0
    %196 = vmatpush1.bf16.msra.mxu0 0
    %197 = vmatprep.subr.bf16.mxu0 0
    %198 = vmatpush1.bf16.msra.mxu0 0
    %199 = vmatprep.mubr.bf16.mxu0 0
    %200 = vmatmul.mubr.bf16.gmra.mrb[0].mxu0 %v102
    %v201 = vpop.f32.mrb[0].mxu0
    %v202 = vadd.f32 0.0, %v201
    %v203 = vpop.f32.mrb[0].mxu0
    %v204 = vpop.f32.mrb[0].mxu0
    %v205 = vpop.f32.mrb[0].mxu0
    %206 = vdwg.mxu0
    %v207 = vld [vmem:[#allocation3] sm:$0xff]
    %209 = vset.pattern.permute.xlu0 0
    %210 = vperm.xlu0 %209, %v207
    %v211 = vpop.permute.xlu0 %210
    %v213 = vmul.f32 %v202, %v211
    %v214 = vpack.c.bf16 %v213, %v213
    %215 = vst [vmem:[#allocation4] sm:$0xf] %v214
    // Predicated region
    $region22: #{texe_embed_classifier.1} parent=1 // pred_check
      _
    $region23: #{texe_embed_classifier.1} parent=1 // pred_check_branch
      %217 = sbr.rel (0) target = $region25
    $region24: #{texe_embed_classifier.1} parent=1 // pred_region
      %s219 = ssub.s32 64, 64
      %220 = vsyncadd [#allocation5], %s219
      %s222 = sshll.u32 [#allocation4], 4
      %s223 = int_to_ptr.vmem [resolvable:$true] %s222
      %225 = dma.vmem_to_hbm [thread:$0]  %s223, 64, %s4, [#allocation5]
    $region25: #{texe_embed_classifier.1} parent=1 // pred_fallthru
      _
    // Predicated region
    $region26: #{texe_embed_classifier.1} parent=1 // pred_check
      _
    $region27: #{texe_embed_classifier.1} parent=1 // pred_check_branch
      %227 = sbr.rel (0) target = $region29
    $region28: #{texe_embed_classifier.1} parent=1 // pred_region
      %228 = dma.done [#allocation5], 64
    $region29: #{texe_embed_classifier.1} parent=1 // pred_fallthru
      _
    %229 = vsyncpa [#allocation5], 1

</llo_original>
